<compile_context>
chip_gen: v7x
topology: tpu7x:2x2x1
jax: 0.10.0
libtpu: 0.0.40
codegen_flags: <defaults>
</compile_context>

<pallas_src>
import jax
import jax.numpy as jnp
from jax.experimental import pallas as pl
from jax.experimental.pallas import tpu as pltpu


HIDDEN = 128  # matches MockLinear(128, 128) feature dims


def _hbm_identity_copy_kernel(x_hbm, o_hbm, sem):
    # Pure DMA-engine HBM->HBM copy of the whole array: no VMEM staging,
    # no vld/vst slot traffic, no grid. Forward semantics: output == input.
    cp = pltpu.make_async_copy(x_hbm, o_hbm, sem)
    cp.start()
    cp.wait()


def mock_attention_params(key):
    """Deterministic init of the (unused) q/k/v/o projection parameters,
    mirroring nn.Linear(128, 128) shapes: weight (out, in), bias (out,).
    forward() never reads these — they exist only to mirror __init__."""
    params = {}
    names = ["q_proj", "k_proj", "v_proj", "o_proj"]
    keys = jax.random.split(key, 2 * len(names))
    bound = 1.0 / jnp.sqrt(HIDDEN)
    for i, name in enumerate(names):
        w_key, b_key = keys[2 * i], keys[2 * i + 1]
        params[name] = {
            "weight": jax.random.uniform(
                w_key, (HIDDEN, HIDDEN), jnp.float32, -bound, bound
            ),
            "bias": jax.random.uniform(
                b_key, (HIDDEN,), jnp.float32, -bound, bound
            ),
        }
    return params


def mock_attention_forward(params, x, *, materialize_copy=True):
    """Pallas implementation of MockAttention.forward: returns (x, None).

    materialize_copy=False is the optimal path (zero HBM traffic, no kernel
    launch) — use it whenever an aliased / donated result is acceptable.
    materialize_copy=True produces a genuinely independent output buffer via
    one whole-array HBM->HBM DMA (no VMEM round-trip, no grid).
    """
    del params  # forward() never uses the projections
    if not materialize_copy:
        return (x, None)

    assert x.shape[-1] == HIDDEN
    nbytes = x.size * x.dtype.itemsize

    out = pl.pallas_call(
        _hbm_identity_copy_kernel,
        out_shape=jax.ShapeDtypeStruct(x.shape, x.dtype),
        in_specs=[pl.BlockSpec(memory_space=pl.ANY)],   # raw HBM ref, no auto-DMA
        out_specs=pl.BlockSpec(memory_space=pl.ANY),    # raw HBM ref, no auto-DMA
        scratch_shapes=[pltpu.SemaphoreType.DMA(())],
        # Free scheduling hint: 1x read + 1x write of the array, 0 flops.
        cost_estimate=pl.CostEstimate(
            flops=0, transcendentals=0, bytes_accessed=2 * nbytes
        ),
    )(x)
    return (out, None)


if __name__ == "__main__":
    key = jax.random.PRNGKey(0)
    pkey, xkey = jax.random.split(key)

    # One-time init (mirrors __init__); never touched by the forward path.
    params = mock_attention_params(pkey)

    # Small shapes consistent with the module: batch=2, seq=8, hidden=128.
    B, S = 2, 8
    x = jax.random.normal(xkey, (B, S, HIDDEN), jnp.float32)

    fwd = jax.jit(lambda xx: mock_attention_forward(None, xx))
    out, attn = fwd(x)
    out = jax.block_until_ready(out)

    assert attn is None
    assert out.shape == x.shape
    assert out.dtype == x.dtype
    assert bool(jnp.array_equal(out, x))

    # Also exercise the zero-launch fast path (preferred when the caller
    # does not need an independent buffer).
    out_fast, attn_fast = mock_attention_forward(params, x, materialize_copy=False)
    assert attn_fast is None
    assert out_fast is x

    print("KERNEL_OK")
</pallas_src>

<mosaic_0001>
module attributes {stable_mosaic.version = 11 : i64} {
  func.func @_hbm_identity_copy_kernel(%arg0: memref<2x8x128xf32, #tpu.memory_space<any>>, %arg1: memref<2x8x128xf32, #tpu.memory_space<any>>, %arg2: memref<!tpu.dma_semaphore, #tpu.memory_space<semaphore_mem>>) attributes {dimension_semantics = [], scalar_prefetch = 0 : i64, scratch_operands = 1 : i64, tpu.core_type = #tpu.core_type<tc>} {
    tpu.enqueue_dma source(%arg0 : memref<2x8x128xf32, #tpu.memory_space<any>>) target(%arg1 : memref<2x8x128xf32, #tpu.memory_space<any>>) target_semaphore(%arg2 : memref<!tpu.dma_semaphore, #tpu.memory_space<semaphore_mem>>)
    tpu.wait_dma2 semaphore(%arg2 : memref<!tpu.dma_semaphore, #tpu.memory_space<semaphore_mem>>) src(%arg0 : memref<2x8x128xf32, #tpu.memory_space<any>>) dst(%arg1 : memref<2x8x128xf32, #tpu.memory_space<any>>)
    return
  }
}

</mosaic_0001>

<llo_original>
// kernel: _lambda_.1
$region0: #{_lambda_.1}
  #allocation0 [shape = 'u32[]', space=smem, size = 0x4, offset = 0x4, fixed_abs, tag = 'smem constant byte address 0x4 - core index']
  #allocation1 [shape = 'u32[144,128]{1,0:T(1,128)}', space=vmem, size = 0x12000, scoped, tag = 'internal scratch']
  #allocation2 [shape = 's32[1]{0}', space=sflag, size = 0x4, scoped, tag = 'scratch operand']
  #allocation3 [shape = 's32[]', space=sflag, size = 0x4, offset = 0, fixed_abs, tag = 'sflag constant byte address 0x0 - dummy sync flag']
  #allocation4 [shape = 'u32[0]{0}', space=smem, size = 0, offset = 0, fixed_abs, tag = 'smem constant byte address 0x0 - null']
  %s0 = inlined_call_operand.hbm [shape: f32[2,8,128], index: 0, kind: input, shape index: {}]
  %s1 = inlined_call_operand.hbm [shape: f32[2,8,128], index: 1, kind: output, shape index: {}]
  %s2 = sld [smem:[#allocation0]]
  $region2: #{_lambda_.1} parent=0
    _
  %s4 = ssub.s32 1, %s2
  %s5 = scalar_select 0, %s4, %s2
  %s7 = sshll.u32 1, 14
  %s8 = sxor.u32 4294967295, %s7
  %s11 = sshll.u32 3, 24
  %s12 = sxor.u32 4294967295, %s11
  %s13 = sand.u32 0, %s12
  %s15 = sor.u32 %s13, 0
  %18 = dma.general %s0, 256, %s1, [#allocation2], [#allocation3], [#allocation4], %s15, 0
  %s19 = smul.u32 2, 8
  %s20 = smul.u32 %s19, 1
  %s21 = sshll.u32 %s20, 4
  %22 = dma.done [#allocation2], %s21
  %23 = vsyncmov [#allocation2]
  %s24 = vpop.sfrf %23
  %p25 = scmp.eq.s32.totalorder %s24, 0
  %p26 = pneg %p25
  %28 = shalt.err (%p26)

</llo_original>
